<compile_context>
chip_gen: v6e
topology: v6e:2x2x1
jax: 0.10.0
libtpu: 0.0.40
codegen_flags: <defaults>
</compile_context>

<pallas_src>
import jax
import jax.numpy as jnp
from jax.experimental import pallas as pl
from jax.experimental.pallas import tpu as pltpu

H = 32     # hidden_size == embedding dim
V = 128    # output_size == vocabulary size (lane-dense vocab output)
T = 16     # encoder sequence length


# ---------------------------------------------------------------------------
# Fused decoder-step kernel:
#   folded-embedding row read -> GRU cell -> fused (scores | rnn-proj) matmul
#   -> attention softmax -> ctx-proj -> tanh -> output proj -> exact softmax
# ---------------------------------------------------------------------------
def decoder_step_kernel(tok_ref, emb_gi_ref, h_ref, enc_fused_ref, enc_proj_ref,
                        w_hh_ref, bias_ref, w_out_ref,
                        out_ref, h_out_ref):
    # ---- embedding folded through W_ih (dynamic sublane slice) ------------
    tok = tok_ref[0]                                   # scalar int32 from SMEM
    # gi = emb[tok] @ W_ih^T + (b_ih_r+b_hh_r | b_ih_z+b_hh_z | b_ih_n)
    gi = emb_gi_ref[pl.ds(tok, 1), :]                  # [1, 3H]
    h = h_ref[...]                                     # [1, H]

    # ---- GRU cell (PyTorch nn.GRU semantics), packed gates r|z|n ----------
    gh = jnp.dot(h, w_hh_ref[...],
                 preferred_element_type=jnp.float32)   # [1, 3H]  (no bias)

    rz = jax.nn.sigmoid(gi[:, :2 * H] + gh[:, :2 * H])                # [1, 2H]
    r = rz[:, :H]
    z = rz[:, H:]
    b_hn = bias_ref[:, :H]                             # hidden n-gate bias
    n = jnp.tanh(gi[:, 2 * H:] + r * (gh[:, 2 * H:] + b_hn))
    h_new = (1.0 - z) * n + z * h                                     # [1, H]
    h_out_ref[...] = h_new

    # ---- fused dot-attention scores + rnn half of the concat projection ---
    # enc_fused = [enc^T | Wc_rnn]  -> one push gives [1, T + H]
    sr = jnp.dot(h_new, enc_fused_ref[...],
                 preferred_element_type=jnp.float32)                  # [1, T+H]
    scores = sr[:, :T]                                                # [1, T]
    rnn_proj = sr[:, T:]                                              # [1, H]

    scores = scores - jnp.max(scores, axis=1, keepdims=True)
    e = jnp.exp(scores)
    attn = e * pl.reciprocal(jnp.sum(e, axis=1, keepdims=True), approx=True)

    # ---- context half of the concat projection (context never formed) -----
    # attn @ (enc @ Wc_ctx) == (attn @ enc) @ Wc_ctx
    ctx_proj = jnp.dot(attn, enc_proj_ref[...],
                       preferred_element_type=jnp.float32)            # [1, H]

    b_c = bias_ref[:, H:2 * H]
    concat_out = jnp.tanh(rnn_proj + ctx_proj + b_c)                  # [1, H]

    # ---- output projection + EXACT softmax over vocab ---------------------
    b_out = bias_ref[:, 2 * H:]
    logits = (jnp.dot(concat_out, w_out_ref[...],
                      preferred_element_type=jnp.float32) + b_out)    # [1, V]
    logits = logits - jnp.max(logits, axis=1, keepdims=True)
    ex = jnp.exp(logits)
    out_ref[...] = ex / jnp.sum(ex, axis=1, keepdims=True)


@jax.jit
def decoder_forward(decoder_input, decoder_hidden, encoder_output, params):
    """Decoder.forward: (output [B,V], hidden [n_layer,B,H]) for B=1, n_layer=1."""
    tok = jnp.clip(decoder_input.reshape((1,)).astype(jnp.int32), 0, V - 1)  # [1]
    h0 = decoder_hidden.reshape((1, H))                       # [1, H]
    enc = encoder_output.reshape((T, H))                      # [T, H]

    # Per-sequence constants (pure layout plumbing + one tiny [T,H]@[H,H]
    # matmul).  In an autoregressive decode loop these are computed once per
    # sequence and reused for every generated token.
    enc_fused = jnp.concatenate([enc.T, params["wc_rnn"]], axis=1)   # [H, T+H]
    enc_proj = enc @ params["wc_ctx"]                                # [T, H]

    vmem = pl.BlockSpec(memory_space=pltpu.MemorySpace.VMEM)
    smem = pl.BlockSpec(memory_space=pltpu.MemorySpace.SMEM)

    output, h_new = pl.pallas_call(
        decoder_step_kernel,
        out_shape=(jax.ShapeDtypeStruct((1, V), jnp.float32),
                   jax.ShapeDtypeStruct((1, H), jnp.float32)),
        in_specs=[smem] + [vmem] * 7,
        out_specs=(vmem, vmem),
        input_output_aliases={2: 1},      # h0 (input 2) aliases h_out (output 1)
    )(tok, params["emb_gi"], h0, enc_fused, enc_proj,
      params["w_hh"], params["bias"], params["w_out"])
    return output, h_new.reshape(decoder_hidden.shape)


# ---------------------------------------------------------------------------
# Parameter handling: deterministic PyTorch-layout params, then repacked into
# the TPU-friendly layout consumed by the kernel.
# ---------------------------------------------------------------------------
def init_raw_params(key):
    shapes = {
        "embedding": (V, H),
        "w_ih": (3 * H, H), "w_hh": (3 * H, H),       # nn.GRU weight_ih/hh_l0
        "b_ih": (3 * H,), "b_hh": (3 * H,),           # gate order r, z, n
        "w_concat": (H, 2 * H), "b_concat": (H,),     # nn.Linear(2H, H)
        "w_out": (V, H), "b_out": (V,),               # nn.Linear(H, V)
    }
    keys = jax.random.split(key, len(shapes))
    return {name: 0.1 * jax.random.normal(k, shp, jnp.float32)
            for k, (name, shp) in zip(keys, shapes.items())}


def pack_params(raw):
    b_ih, b_hh = raw["b_ih"], raw["b_hh"]
    # fused r/z biases + input n-gate bias (hidden n-gate bias stays separate
    # because PyTorch keeps it inside r * (...))
    b_g = jnp.concatenate([b_ih[:2 * H] + b_hh[:2 * H], b_ih[2 * H:]])     # [3H]
    emb_gi = raw["embedding"] @ raw["w_ih"].T + b_g[None, :]               # [V, 3H]
    return {
        "emb_gi": emb_gi,                                      # [V, 3H]  r|z|n
        "w_hh": raw["w_hh"].T,                                 # [H, 3H]
        "wc_rnn": raw["w_concat"][:, :H].T,                    # [H, H] (fused w/ enc_t)
        "wc_ctx": raw["w_concat"][:, H:].T,                    # [H, H] (folds into enc_proj)
        # lane-dense bias slab: [b_hh_n | b_concat | b_out]
        "bias": jnp.concatenate(
            [b_hh[2 * H:], raw["b_concat"], raw["b_out"]])[None, :],   # [1, 2H+V]
        "w_out": raw["w_out"].T,                               # [H, V]
    }


# ---------------------------------------------------------------------------
# Pure-JAX reference mirroring the PyTorch Decoder.forward exactly (raw layout)
# ---------------------------------------------------------------------------
def decoder_forward_reference(decoder_input, decoder_hidden, encoder_output, raw):
    tok = decoder_input[0, 0]
    x = raw["embedding"][tok][None, :]                         # [1, H]
    h = decoder_hidden[0]                                      # [1, H]
    gi = x @ raw["w_ih"].T + raw["b_ih"]
    gh = h @ raw["w_hh"].T + raw["b_hh"]
    r = jax.nn.sigmoid(gi[:, :H] + gh[:, :H])
    z = jax.nn.sigmoid(gi[:, H:2 * H] + gh[:, H:2 * H])
    n = jnp.tanh(gi[:, 2 * H:] + r * gh[:, 2 * H:])
    h_new = (1.0 - z) * n + z * h                              # decoder_output
    enc = encoder_output[:, 0, :]                              # [T, H]
    scores = jnp.sum(h_new * enc, axis=-1)[None, :]            # [1, T] (== .t())
    attn = jax.nn.softmax(scores, axis=1)
    context = attn @ enc                                       # [1, H]
    concat_in = jnp.concatenate([h_new, context], axis=1)      # [1, 2H]
    concat_out = jnp.tanh(concat_in @ raw["w_concat"].T + raw["b_concat"])
    output = jax.nn.softmax(concat_out @ raw["w_out"].T + raw["b_out"], axis=1)
    return output, h_new[None]                                 # [1,V], [1,1,H]


if __name__ == "__main__":
    key = jax.random.PRNGKey(0)
    k_par, k_tok, k_hid, k_enc = jax.random.split(key, 4)

    raw = init_raw_params(k_par)
    params = pack_params(raw)

    decoder_input = jax.random.randint(k_tok, (1, 1), 0, V, dtype=jnp.int32)  # [1, 1]
    decoder_hidden = 0.1 * jax.random.normal(k_hid, (1, 1, H), jnp.float32)   # [n_layer, B, H]
    encoder_output = 0.1 * jax.random.normal(k_enc, (T, 1, H), jnp.float32)   # [T, B, H]

    output, hidden = decoder_forward(decoder_input, decoder_hidden,
                                     encoder_output, params)
    jax.block_until_ready((output, hidden))

    assert output.shape == (1, V) and hidden.shape == (1, 1, H)
    assert bool(jnp.isfinite(output).all()) and bool(jnp.isfinite(hidden).all())
    assert abs(float(output.sum()) - 1.0) < 1e-3     # exact vocab softmax now

    out_ref, hid_ref = decoder_forward_reference(decoder_input, decoder_hidden,
                                                 encoder_output, raw)
    # Hidden path is exact arithmetic; output path only carries the approx
    # reciprocal of the attention softmax -> tight tolerances.
    assert jnp.allclose(hidden, hid_ref, rtol=1e-3, atol=1e-4)
    assert jnp.allclose(output, out_ref, rtol=1e-2, atol=1e-3)

    print("KERNEL_OK")
</pallas_src>

<mosaic_0001>
module attributes {stable_mosaic.version = 11 : i64} {
  func.func @decoder_step_kernel(%arg0: memref<1xi32, #tpu.memory_space<smem>>, %arg1: memref<128x96xf32, #tpu.memory_space<vmem>>, %arg2: memref<1x32xf32, #tpu.memory_space<vmem>>, %arg3: memref<32x48xf32, #tpu.memory_space<vmem>>, %arg4: memref<16x32xf32, #tpu.memory_space<vmem>>, %arg5: memref<32x96xf32, #tpu.memory_space<vmem>>, %arg6: memref<1x192xf32, #tpu.memory_space<vmem>>, %arg7: memref<32x128xf32, #tpu.memory_space<vmem>>, %arg8: memref<1x128xf32, #tpu.memory_space<vmem>>, %arg9: memref<1x32xf32, #tpu.memory_space<vmem>>) attributes {dimension_semantics = [], scalar_prefetch = 0 : i64, scratch_operands = 0 : i64, tpu.core_type = #tpu.core_type<tc>} {
    %c0 = arith.constant 0 : index
    %0 = memref.load %arg0[%c0] : memref<1xi32, #tpu.memory_space<smem>>
    %1 = arith.index_cast %0 : i32 to index
    %c0_0 = arith.constant 0 : index
    %2 = vector.load %arg1[%1, %c0_0] : memref<128x96xf32, #tpu.memory_space<vmem>>, vector<1x96xf32>
    %c0_1 = arith.constant 0 : index
    %c0_2 = arith.constant 0 : index
    %3 = vector.load %arg2[%c0_1, %c0_2] : memref<1x32xf32, #tpu.memory_space<vmem>>, vector<1x32xf32>
    %c0_3 = arith.constant 0 : index
    %c0_4 = arith.constant 0 : index
    %4 = vector.load %arg5[%c0_3, %c0_4] : memref<32x96xf32, #tpu.memory_space<vmem>>, vector<32x96xf32>
    %cst = arith.constant dense<0.000000e+00> : vector<1x96xf32>
    %5 = tpu.matmul %3, %4, %cst {dimension_numbers = #tpu.dot_dimension_numbers<[1], [0], [0], [1], [0, 0, 1, 1], [], []>} : vector<1x32xf32>, vector<32x96xf32>, vector<1x96xf32> -> vector<1x96xf32>
    %6 = vector.extract_strided_slice %2 {offsets = [0, 0], sizes = [1, 64], strides = [1, 1]} : vector<1x96xf32> to vector<1x64xf32>
    %7 = vector.extract_strided_slice %5 {offsets = [0, 0], sizes = [1, 64], strides = [1, 1]} : vector<1x96xf32> to vector<1x64xf32>
    %8 = arith.addf %6, %7 : vector<1x64xf32>
    %9 = arith.negf %8 : vector<1x64xf32>
    %10 = math.exp %9 : vector<1x64xf32>
    %cst_5 = arith.constant 1.000000e+00 : f32
    %11 = vector.broadcast %cst_5 : f32 to vector<1x64xf32>
    %12 = arith.addf %11, %10 : vector<1x64xf32>
    %13 = arith.divf %11, %12 : vector<1x64xf32>
    %14 = vector.extract_strided_slice %13 {offsets = [0, 0], sizes = [1, 32], strides = [1, 1]} : vector<1x64xf32> to vector<1x32xf32>
    %15 = vector.extract_strided_slice %13 {offsets = [0, 32], sizes = [1, 32], strides = [1, 1]} : vector<1x64xf32> to vector<1x32xf32>
    %c0_6 = arith.constant 0 : index
    %c0_7 = arith.constant 0 : index
    %16 = vector.load %arg6[%c0_6, %c0_7] : memref<1x192xf32, #tpu.memory_space<vmem>>, vector<1x32xf32>
    %17 = vector.extract_strided_slice %2 {offsets = [0, 64], sizes = [1, 32], strides = [1, 1]} : vector<1x96xf32> to vector<1x32xf32>
    %18 = vector.extract_strided_slice %5 {offsets = [0, 64], sizes = [1, 32], strides = [1, 1]} : vector<1x96xf32> to vector<1x32xf32>
    %19 = arith.addf %18, %16 : vector<1x32xf32>
    %20 = arith.mulf %14, %19 : vector<1x32xf32>
    %21 = arith.addf %17, %20 : vector<1x32xf32>
    %22 = math.tanh %21 : vector<1x32xf32>
    %cst_8 = arith.constant 1.000000e+00 : f32
    %23 = vector.broadcast %cst_8 : f32 to vector<1x32xf32>
    %24 = arith.subf %23, %15 : vector<1x32xf32>
    %25 = arith.mulf %24, %22 : vector<1x32xf32>
    %26 = arith.mulf %15, %3 : vector<1x32xf32>
    %27 = arith.addf %25, %26 : vector<1x32xf32>
    %c0_9 = arith.constant 0 : index
    %c0_10 = arith.constant 0 : index
    %28 = vector.load %arg9[%c0_9, %c0_10] : memref<1x32xf32, #tpu.memory_space<vmem>>, vector<1x32xf32>
    tpu.vector_store %arg9[%c0_9, %c0_10], %27 {strides = array<i32>} : memref<1x32xf32, #tpu.memory_space<vmem>>, vector<1x32xf32>,
    %c0_11 = arith.constant 0 : index
    %c0_12 = arith.constant 0 : index
    %29 = vector.load %arg3[%c0_11, %c0_12] : memref<32x48xf32, #tpu.memory_space<vmem>>, vector<32x48xf32>
    %cst_13 = arith.constant dense<0.000000e+00> : vector<1x48xf32>
    %30 = tpu.matmul %27, %29, %cst_13 {dimension_numbers = #tpu.dot_dimension_numbers<[1], [0], [0], [1], [0, 0, 1, 1], [], []>} : vector<1x32xf32>, vector<32x48xf32>, vector<1x48xf32> -> vector<1x48xf32>
    %31 = vector.extract_strided_slice %30 {offsets = [0, 0], sizes = [1, 16], strides = [1, 1]} : vector<1x48xf32> to vector<1x16xf32>
    %32 = vector.extract_strided_slice %30 {offsets = [0, 16], sizes = [1, 32], strides = [1, 1]} : vector<1x48xf32> to vector<1x32xf32>
    %cst_14 = arith.constant dense<0xFF800000> : vector<1xf32>
    %33 = vector.multi_reduction <maximumf>, %31, %cst_14 [1] : vector<1x16xf32> to vector<1xf32>
    %34 = vector.shape_cast %33 : vector<1xf32> to vector<1x1xf32>
    %35 = vector.broadcast %34 : vector<1x1xf32> to vector<1x16xf32>
    %36 = arith.subf %31, %35 : vector<1x16xf32>
    %37 = math.exp %36 : vector<1x16xf32>
    %cst_15 = arith.constant dense<0.000000e+00> : vector<1xf32>
    %38 = vector.multi_reduction <add>, %37, %cst_15 [1] : vector<1x16xf32> to vector<1xf32>
    %39 = vector.shape_cast %38 : vector<1xf32> to vector<1x1xf32>
    %40 = tpu.reciprocal %39 {approx = true} : vector<1x1xf32> -> vector<1x1xf32>
    %41 = vector.broadcast %40 : vector<1x1xf32> to vector<1x16xf32>
    %42 = arith.mulf %37, %41 : vector<1x16xf32>
    %c0_16 = arith.constant 0 : index
    %c0_17 = arith.constant 0 : index
    %43 = vector.load %arg4[%c0_16, %c0_17] : memref<16x32xf32, #tpu.memory_space<vmem>>, vector<16x32xf32>
    %cst_18 = arith.constant dense<0.000000e+00> : vector<1x32xf32>
    %44 = tpu.matmul %42, %43, %cst_18 {dimension_numbers = #tpu.dot_dimension_numbers<[1], [0], [0], [1], [0, 0, 1, 1], [], []>} : vector<1x16xf32>, vector<16x32xf32>, vector<1x32xf32> -> vector<1x32xf32>
    %c0_19 = arith.constant 0 : index
    %c32 = arith.constant 32 : index
    %45 = vector.load %arg6[%c0_19, %c32] : memref<1x192xf32, #tpu.memory_space<vmem>>, vector<1x32xf32>
    %46 = arith.addf %32, %44 : vector<1x32xf32>
    %47 = arith.addf %46, %45 : vector<1x32xf32>
    %48 = math.tanh %47 : vector<1x32xf32>
    %c0_20 = arith.constant 0 : index
    %c64 = arith.constant 64 : index
    %49 = vector.load %arg6[%c0_20, %c64] : memref<1x192xf32, #tpu.memory_space<vmem>>, vector<1x128xf32>
    %c0_21 = arith.constant 0 : index
    %c0_22 = arith.constant 0 : index
    %50 = vector.load %arg7[%c0_21, %c0_22] : memref<32x128xf32, #tpu.memory_space<vmem>>, vector<32x128xf32>
    %cst_23 = arith.constant dense<0.000000e+00> : vector<1x128xf32>
    %51 = tpu.matmul %48, %50, %cst_23 {dimension_numbers = #tpu.dot_dimension_numbers<[1], [0], [0], [1], [0, 0, 1, 1], [], []>} : vector<1x32xf32>, vector<32x128xf32>, vector<1x128xf32> -> vector<1x128xf32>
    %52 = arith.addf %51, %49 : vector<1x128xf32>
    %cst_24 = arith.constant dense<0xFF800000> : vector<1xf32>
    %53 = vector.multi_reduction <maximumf>, %52, %cst_24 [1] : vector<1x128xf32> to vector<1xf32>
    %54 = vector.shape_cast %53 : vector<1xf32> to vector<1x1xf32>
    %55 = vector.broadcast %54 : vector<1x1xf32> to vector<1x128xf32>
    %56 = arith.subf %52, %55 : vector<1x128xf32>
    %57 = math.exp %56 : vector<1x128xf32>
    %cst_25 = arith.constant dense<0.000000e+00> : vector<1xf32>
    %58 = vector.multi_reduction <add>, %57, %cst_25 [1] : vector<1x128xf32> to vector<1xf32>
    %59 = vector.shape_cast %58 : vector<1xf32> to vector<1x1xf32>
    %60 = vector.broadcast %59 : vector<1x1xf32> to vector<1x128xf32>
    %61 = arith.divf %57, %60 : vector<1x128xf32>
    %c0_26 = arith.constant 0 : index
    %c0_27 = arith.constant 0 : index
    %62 = vector.load %arg8[%c0_26, %c0_27] : memref<1x128xf32, #tpu.memory_space<vmem>>, vector<1x128xf32>
    tpu.vector_store %arg8[%c0_26, %c0_27], %61 {strides = array<i32>} : memref<1x128xf32, #tpu.memory_space<vmem>>, vector<1x128xf32>,
    return
  }
}

</mosaic_0001>

<llo_original>
// kernel: decoder_forward.1
$region0: #{decoder_forward.1}
  #allocation0 [shape = 'u32[]', space=smem, size = 0x4, offset = 0x4, fixed_abs, tag = 'smem constant byte address 0x4 - core index']
  #allocation1 [shape = 'u32[144,128]{1,0:T(1,128)}', space=vmem, size = 0x12000, scoped, tag = 'internal scratch']
  #allocation2 [shape = 's32[1]{0:T(128)S(6)}', space=smem, size = 0x200, scoped, tag = 'scoped memory for decoder_forward.1']
  %s0 = inlined_call_operand.<no memory space> [shape: s32[1], index: 0, kind: input, shape index: {}]
  %s1 = inlined_call_operand.vmem [shape: f32[128,96], index: 1, kind: input, shape index: {}]
  %s2 = inlined_call_operand.vmem [shape: f32[1,32], index: 2, kind: input, shape index: {}, may-alias: {2,9}]
  %s3 = inlined_call_operand.vmem [shape: f32[32,48], index: 3, kind: input, shape index: {}]
  %s4 = inlined_call_operand.vmem [shape: f32[16,32], index: 4, kind: input, shape index: {}]
  %s5 = inlined_call_operand.vmem [shape: f32[32,96], index: 5, kind: input, shape index: {}]
  %s6 = inlined_call_operand.vmem [shape: f32[1,192], index: 6, kind: input, shape index: {}]
  %s7 = inlined_call_operand.vmem [shape: f32[32,128], index: 7, kind: input, shape index: {}]
  %s8 = inlined_call_operand.hbm [shape: f32[1,128], index: 8, kind: output, shape index: {0}]
  %s9 = inlined_call_operand.vmem [shape: f32[1,32], index: 9, kind: output, shape index: {1}, may-alias: {2,9}]
  %10 = xla_tuple %s8, %s9
  %s11 = sld [smem:[#allocation0]]
  $region50: #{decoder_forward.1} parent=0
    _
  %s13 = ssub.s32 1, %s11
  %s14 = scalar_select 0, %s13, %s11
  %15 = sst [smem:[#allocation2]] %s0
  $region1: #{decoder_forward.1} parent=0
    #allocation3 [shape = 'u8[512]{0}', space=vmem, size = 0x400, scoped, tag = 'output window, operand 0, single buffered']
    #allocation4 [shape = 's32[1]{0}', space=sflag, size = 0x4, scoped, tag = 'scoped memory for decoder_forward.1']
    %16 = vsyncpa [#allocation4], 0
    // Predicated region
    $region2: #{decoder_forward.1} parent=1 // pred_check
      _
    $region3: #{decoder_forward.1} parent=1 // pred_check_branch
      %18 = sbr.rel (0) target = $region5
    $region4: #{decoder_forward.1} parent=1 // pred_region
      _
    $region5: #{decoder_forward.1} parent=1 // pred_fallthru
      _
    // Predicated region
    $region6: #{decoder_forward.1} parent=1 // pred_check
      _
    $region7: #{decoder_forward.1} parent=1 // pred_check_branch
      %20 = sbr.rel (0) target = $region9
    $region8: #{decoder_forward.1} parent=1 // pred_region
      _
    $region9: #{decoder_forward.1} parent=1 // pred_fallthru
      _
    // Predicated region
    $region10: #{decoder_forward.1} parent=1 // pred_check
      _
    $region11: #{decoder_forward.1} parent=1 // pred_check_branch
      %22 = sbr.rel (0) target = $region13
    $region12: #{decoder_forward.1} parent=1 // pred_region
      _
    $region13: #{decoder_forward.1} parent=1 // pred_fallthru
      _
    // Predicated region
    $region14: #{decoder_forward.1} parent=1 // pred_check
      _
    $region15: #{decoder_forward.1} parent=1 // pred_check_branch
      %24 = sbr.rel (0) target = $region17
    $region16: #{decoder_forward.1} parent=1 // pred_region
      _
    $region17: #{decoder_forward.1} parent=1 // pred_fallthru
      _
    // Predicated region
    $region18: #{decoder_forward.1} parent=1 // pred_check
      _
    $region19: #{decoder_forward.1} parent=1 // pred_check_branch
      %26 = sbr.rel (0) target = $region21
    $region20: #{decoder_forward.1} parent=1 // pred_region
      _
    $region21: #{decoder_forward.1} parent=1 // pred_fallthru
      _
    // Predicated region
    $region22: #{decoder_forward.1} parent=1 // pred_check
      _
    $region23: #{decoder_forward.1} parent=1 // pred_check_branch
      %28 = sbr.rel (0) target = $region25
    $region24: #{decoder_forward.1} parent=1 // pred_region
      _
    $region25: #{decoder_forward.1} parent=1 // pred_fallthru
      _
    // Predicated region
    $region26: #{decoder_forward.1} parent=1 // pred_check
      _
    $region27: #{decoder_forward.1} parent=1 // pred_check_branch
      %30 = sbr.rel (0) target = $region29
    $region28: #{decoder_forward.1} parent=1 // pred_region
      _
    $region29: #{decoder_forward.1} parent=1 // pred_fallthru
      _
    // Predicated region
    $region30: #{decoder_forward.1} parent=1 // pred_check
      _
    $region31: #{decoder_forward.1} parent=1 // pred_check_branch
      %32 = sbr.rel (0) target = $region33
    $region32: #{decoder_forward.1} parent=1 // pred_region
      _
    $region33: #{decoder_forward.1} parent=1 // pred_fallthru
      _
    %s33 = sld [smem:[#allocation2]]
    %s34 = scalar_lea.vmem %s1, %s33
    %v35 = vld [vmem:[%s34] sm:$0x1]
    %v36 = vld [vmem:[%s2] sm:$0x1]
    %v37 = vld [vmem:[%s5] sm:$0xff]
    %v38 = vld [vmem:[%s5 + $0x8] sm:$0xff]
    %v39 = vld [vmem:[%s5 + $0x10] sm:$0xff]
    %v40 = vld [vmem:[%s5 + $0x18] sm:$0xff]
    %vm41 = vcmask 261120
    %v43 = vsel %vm41, %v36, 0
    %45 = vmatprep.subr.mxu0 0.0
    %46 = vmatpush1.msra.mxu0 0.0
    %47 = vmatprep.subr.mxu0 0.0
    %48 = vmatpush1.msra.mxu0 0.0
    %49 = vmatprep.subr.mxu0 0.0
    %50 = vmatpush1.msra.mxu0 0.0
    %51 = vmatprep.subr.mxu0 0.0
    %52 = vmatpush1.msra.mxu0 0.0
    %53 = vmatprep.subr.mxu0 0.0
    %54 = vmatpush1.msra.mxu0 0.0
    %55 = vmatprep.subr.mxu0 0.0
    %56 = vmatpush1.msra.mxu0 0.0
    %57 = vmatprep.subr.mxu0 0.0
    %58 = vmatpush1.msra.mxu0 0.0
    %59 = vmatprep.subr.mxu0 0.0
    %60 = vmatpush1.msra.mxu0 0.0
    %61 = vmatprep.subr.mxu0 0.0
    %62 = vmatpush1.msra.mxu0 0.0
    %63 = vmatprep.subr.mxu0 0.0
    %64 = vmatpush1.msra.mxu0 0.0
    %65 = vmatprep.subr.mxu0 0.0
    %66 = vmatpush1.msra.mxu0 0.0
    %67 = vmatprep.subr.mxu0 0.0
    %68 = vmatpush1.msra.mxu0 0.0
    %69 = vmatprep.subr.mxu0 0.0
    %70 = vmatpush1.msra.mxu0 %v40
    %71 = vmatprep.subr.mxu0 0.0
    %72 = vmatpush1.msra.mxu0 %v39
    %73 = vmatprep.subr.mxu0 0.0
    %74 = vmatpush1.msra.mxu0 %v38
    %75 = vmatprep.subr.mxu0 0.0
    %76 = vmatpush1.msra.mxu0 %v37
    %77 = vmatprep.subr.mxu0 0.0
    %78 = vmatpush2.msra.mxu0 0.0
    %79 = vmatprep.subr.mxu0 0.0
    %80 = vmatpush2.msra.mxu0 0.0
    %81 = vmatprep.subr.mxu0 0.0
    %82 = vmatpush2.msra.mxu0 0.0
    %83 = vmatprep.subr.mxu0 0.0
    %84 = vmatpush2.msra.mxu0 0.0
    %85 = vmatprep.subr.mxu0 0.0
    %86 = vmatpush2.msra.mxu0 0.0
    %87 = vmatprep.subr.mxu0 0.0
    %88 = vmatpush2.msra.mxu0 0.0
    %89 = vmatprep.subr.mxu0 0.0
    %90 = vmatpush2.msra.mxu0 0.0
    %91 = vmatprep.subr.mxu0 0.0
    %92 = vmatpush2.msra.mxu0 0.0
    %93 = vmatprep.subr.mxu0 0.0
    %94 = vmatpush2.msra.mxu0 0.0
    %95 = vmatprep.subr.mxu0 0.0
    %96 = vmatpush2.msra.mxu0 0.0
    %97 = vmatprep.subr.mxu0 0.0
    %98 = vmatpush2.msra.mxu0 0.0
    %99 = vmatprep.subr.mxu0 0.0
    %100 = vmatpush2.msra.mxu0 0.0
    %101 = vmatprep.subr.mxu0 0.0
    %102 = vmatpush2.msra.mxu0 0.0
    %103 = vmatprep.subr.mxu0 0.0
    %104 = vmatpush2.msra.mxu0 0.0
    %105 = vmatprep.subr.mxu0 0.0
    %106 = vmatpush2.msra.mxu0 0.0
    %107 = vmatprep.subr.mxu0 0.0
    %108 = vmatpush2.msra.mxu0 0.0
    %109 = vmatprep.mubr.f32.mxu0 0.0
    %110 = vmatmul.mubr.f32.gmra.mxu0 %v43
    %v111 = vpop.f32.mrf.mxu0
    %v112 = vadd.f32 0.0, %v111
    %v113 = vpop.f32.mrf.mxu0
    %114 = vdwg.mxu0
    %v115 = vadd.f32 %v35, %v112
    %v116 = vxor.u32 %v115, 2147483648
    %v117 = vmul.f32 %v116, 1.442695
    %v118 = vpow.pop %v117
    %v119 = vadd.f32 %v118, 1.0
    %v120 = vrcp.pop %v119
    %v121 = vmul.f32 1.0, %v120
    %v122 = vld [vmem:[%s6] sm:$0x1]
    %v124 = vlaneseq
    %v125 = vshrl.u32 %v124, 7
    %v126 = vsub.s32 0, %v125
    %v127 = vrot.slane %v122, %v126
    %128 = vrot.lane.b32.xlu0 %v127, 64
    %v129 = vpop.permute.xlu0 %128
    %v131 = vadd.f32 %v112, %v129
    %133 = vrot.lane.b32.xlu0 %v131, 64
    %v134 = vpop.permute.xlu0 %133
    %v136 = vmul.f32 %v121, %v134
    %138 = vrot.lane.b32.xlu0 %v136, 64
    %v139 = vpop.permute.xlu0 %138
    %v141 = vadd.f32 %v35, %v139
    %v142 = vtanh.pop %v141
    %v143 = vsub.f32 1.0, %v121
    %145 = vrot.lane.b32.xlu0 %v142, 96
    %v146 = vpop.permute.xlu0 %145
    %v148 = vmul.f32 %v143, %v146
    %v149 = vlaneseq
    %v150 = vshrl.u32 %v149, 7
    %v151 = vsub.s32 0, %v150
    %v152 = vrot.slane %v36, %v151
    %153 = vrot.lane.b32.xlu0 %v152, 32
    %v154 = vpop.permute.xlu0 %153
    %v156 = vmul.f32 %v121, %v154
    %v157 = vadd.f32 %v148, %v156
    %159 = vrot.lane.b32.xlu0 %v157, 96
    %v160 = vpop.permute.xlu0 %159
    %vm162 = vcmask 253952
    %163 = vst.msk [vmem:[%s9] sm:$0x1] %vm162, %v160
    %v164 = vld [vmem:[%s3] sm:$0xff]
    %v165 = vld [vmem:[%s3 + $0x8] sm:$0xff]
    %v166 = vld [vmem:[%s3 + $0x10] sm:$0xff]
    %v167 = vld [vmem:[%s3 + $0x18] sm:$0xff]
    %v168 = vsel %vm41, %v160, 0
    %170 = vmatprep.subr.mxu0 0.0
    %171 = vmatpush1.msra.mxu0 0.0
    %172 = vmatprep.subr.mxu0 0.0
    %173 = vmatpush1.msra.mxu0 0.0
    %174 = vmatprep.subr.mxu0 0.0
    %175 = vmatpush1.msra.mxu0 0.0
    %176 = vmatprep.subr.mxu0 0.0
    %177 = vmatpush1.msra.mxu0 0.0
    %178 = vmatprep.subr.mxu0 0.0
    %179 = vmatpush1.msra.mxu0 0.0
    %180 = vmatprep.subr.mxu0 0.0
    %181 = vmatpush1.msra.mxu0 0.0
    %182 = vmatprep.subr.mxu0 0.0
    %183 = vmatpush1.msra.mxu0 0.0
    %184 = vmatprep.subr.mxu0 0.0
    %185 = vmatpush1.msra.mxu0 0.0
    %186 = vmatprep.subr.mxu0 0.0
    %187 = vmatpush1.msra.mxu0 0.0
    %188 = vmatprep.subr.mxu0 0.0
    %189 = vmatpush1.msra.mxu0 0.0
    %190 = vmatprep.subr.mxu0 0.0
    %191 = vmatpush1.msra.mxu0 0.0
    %192 = vmatprep.subr.mxu0 0.0
    %193 = vmatpush1.msra.mxu0 0.0
    %194 = vmatprep.subr.mxu0 0.0
    %195 = vmatpush1.msra.mxu0 %v167
    %196 = vmatprep.subr.mxu0 0.0
    %197 = vmatpush1.msra.mxu0 %v166
    %198 = vmatprep.subr.mxu0 0.0
    %199 = vmatpush1.msra.mxu0 %v165
    %200 = vmatprep.subr.mxu0 0.0
    %201 = vmatpush1.msra.mxu0 %v164
    %202 = vmatprep.subr.mxu0 0.0
    %203 = vmatpush2.msra.mxu0 0.0
    %204 = vmatprep.subr.mxu0 0.0
    %205 = vmatpush2.msra.mxu0 0.0
    %206 = vmatprep.subr.mxu0 0.0
    %207 = vmatpush2.msra.mxu0 0.0
    %208 = vmatprep.subr.mxu0 0.0
    %209 = vmatpush2.msra.mxu0 0.0
    %210 = vmatprep.subr.mxu0 0.0
    %211 = vmatpush2.msra.mxu0 0.0
    %212 = vmatprep.subr.mxu0 0.0
    %213 = vmatpush2.msra.mxu0 0.0
    %214 = vmatprep.subr.mxu0 0.0
    %215 = vmatpush2.msra.mxu0 0.0
    %216 = vmatprep.subr.mxu0 0.0
    %217 = vmatpush2.msra.mxu0 0.0
    %218 = vmatprep.subr.mxu0 0.0
    %219 = vmatpush2.msra.mxu0 0.0
    %220 = vmatprep.subr.mxu0 0.0
    %221 = vmatpush2.msra.mxu0 0.0
    %222 = vmatprep.subr.mxu0 0.0
    %223 = vmatpush2.msra.mxu0 0.0
    %224 = vmatprep.subr.mxu0 0.0
    %225 = vmatpush2.msra.mxu0 0.0
    %226 = vmatprep.subr.mxu0 0.0
    %227 = vmatpush2.msra.mxu0 0.0
    %228 = vmatprep.subr.mxu0 0.0
    %229 = vmatpush2.msra.mxu0 0.0
    %230 = vmatprep.subr.mxu0 0.0
    %231 = vmatpush2.msra.mxu0 0.0
    %232 = vmatprep.subr.mxu0 0.0
    %233 = vmatpush2.msra.mxu0 0.0
    %234 = vmatprep.mubr.f32.mxu0 0.0
    %235 = vmatmul.mubr.f32.gmra.mxu0 %v168
    %v236 = vpop.f32.mrf.mxu0
    %v237 = vadd.f32 0.0, %v236
    %v238 = vpop.f32.mrf.mxu0
    %239 = vdwg.mxu0
    %vm240 = vcmask 122880
    %v241 = vsel %vm240, %v237, -inf
    %242 = vmax.xlane.f32.xlu0 %v241
    %v243 = vpop.xlane.xlu0 %242
    %v244 = vsub.f32 %v237, %v243
    %v245 = vmul.f32 %v244, 1.442695
    %v246 = vpow.pop %v245
    %v247 = vsel %vm240, %v246, 0.0
    %248 = vadd.xlane.f32.xlu0 %v247
    %v249 = vpop.xlane.xlu0 %248
    %v250 = vrcp.pop %v249
    %v251 = vmul.f32 %v246, %v250
    %v252 = vld [vmem:[%s4] sm:$0xff]
    %v253 = vld [vmem:[%s4 + $0x8] sm:$0xff]
    %vm254 = vcmask 130048
    %v256 = vsel %vm254, %v251, 0
    %258 = vmatprep.subr.mxu0 0.0
    %259 = vmatpush1.msra.mxu0 0.0
    %260 = vmatprep.subr.mxu0 0.0
    %261 = vmatpush1.msra.mxu0 0.0
    %262 = vmatprep.subr.mxu0 0.0
    %263 = vmatpush1.msra.mxu0 0.0
    %264 = vmatprep.subr.mxu0 0.0
    %265 = vmatpush1.msra.mxu0 0.0
    %266 = vmatprep.subr.mxu0 0.0
    %267 = vmatpush1.msra.mxu0 0.0
    %268 = vmatprep.subr.mxu0 0.0
    %269 = vmatpush1.msra.mxu0 0.0
    %270 = vmatprep.subr.mxu0 0.0
    %271 = vmatpush1.msra.mxu0 0.0
    %272 = vmatprep.subr.mxu0 0.0
    %273 = vmatpush1.msra.mxu0 0.0
    %274 = vmatprep.subr.mxu0 0.0
    %275 = vmatpush1.msra.mxu0 0.0
    %276 = vmatprep.subr.mxu0 0.0
    %277 = vmatpush1.msra.mxu0 0.0
    %278 = vmatprep.subr.mxu0 0.0
    %279 = vmatpush1.msra.mxu0 0.0
    %280 = vmatprep.subr.mxu0 0.0
    %281 = vmatpush1.msra.mxu0 0.0
    %282 = vmatprep.subr.mxu0 0.0
    %283 = vmatpush1.msra.mxu0 0.0
    %284 = vmatprep.subr.mxu0 0.0
    %285 = vmatpush1.msra.mxu0 0.0
    %286 = vmatprep.subr.mxu0 0.0
    %287 = vmatpush1.msra.mxu0 %v253
    %288 = vmatprep.subr.mxu0 0.0
    %289 = vmatpush1.msra.mxu0 %v252
    %290 = vmatprep.subr.mxu0 0.0
    %291 = vmatpush2.msra.mxu0 0.0
    %292 = vmatprep.subr.mxu0 0.0
    %293 = vmatpush2.msra.mxu0 0.0
    %294 = vmatprep.subr.mxu0 0.0
    %295 = vmatpush2.msra.mxu0 0.0
    %296 = vmatprep.subr.mxu0 0.0
    %297 = vmatpush2.msra.mxu0 0.0
    %298 = vmatprep.subr.mxu0 0.0
    %299 = vmatpush2.msra.mxu0 0.0
    %300 = vmatprep.subr.mxu0 0.0
    %301 = vmatpush2.msra.mxu0 0.0
    %302 = vmatprep.subr.mxu0 0.0
    %303 = vmatpush2.msra.mxu0 0.0
    %304 = vmatprep.subr.mxu0 0.0
    %305 = vmatpush2.msra.mxu0 0.0
    %306 = vmatprep.subr.mxu0 0.0
    %307 = vmatpush2.msra.mxu0 0.0
    %308 = vmatprep.subr.mxu0 0.0
    %309 = vmatpush2.msra.mxu0 0.0
    %310 = vmatprep.subr.mxu0 0.0
    %311 = vmatpush2.msra.mxu0 0.0
    %312 = vmatprep.subr.mxu0 0.0
    %313 = vmatpush2.msra.mxu0 0.0
    %314 = vmatprep.subr.mxu0 0.0
    %315 = vmatpush2.msra.mxu0 0.0
    %316 = vmatprep.subr.mxu0 0.0
    %317 = vmatpush2.msra.mxu0 0.0
    %318 = vmatprep.subr.mxu0 0.0
    %319 = vmatpush2.msra.mxu0 0.0
    %320 = vmatprep.subr.mxu0 0.0
    %321 = vmatpush2.msra.mxu0 0.0
    %322 = vmatprep.mubr.f32.mxu0 0.0
    %323 = vmatmul.mubr.f32.gmra.mxu0 %v256
    %v324 = vpop.f32.mrf.mxu0
    %v325 = vadd.f32 0.0, %v324
    %v326 = vpop.f32.mrf.mxu0
    %327 = vdwg.mxu0
    %v328 = vld [vmem:[%s6] sm:$0x1]
    %330 = vrot.lane.b32.xlu0 %v325, 16
    %v331 = vpop.permute.xlu0 %330
    %v333 = vadd.f32 %v237, %v331
    %v335 = vlaneseq
    %v336 = vshrl.u32 %v335, 7
    %v337 = vsub.s32 0, %v336
    %v338 = vrot.slane %v328, %v337
    %339 = vrot.lane.b32.xlu0 %v338, 112
    %v340 = vpop.permute.xlu0 %339
    %v342 = vadd.f32 %v333, %v340
    %v343 = vtanh.pop %v342
    %v344 = vld [vmem:[%s6] sm:$0x3]
    %v345 = vld [vmem:[%s7] sm:$0xff]
    %v346 = vld [vmem:[%s7 + $0x8] sm:$0xff]
    %v347 = vld [vmem:[%s7 + $0x10] sm:$0xff]
    %v348 = vld [vmem:[%s7 + $0x18] sm:$0xff]
    %350 = vrot.lane.b32.xlu0 %v343, 112
    %v351 = vpop.permute.xlu0 %350
    %v353 = vlaneseq
    %v354 = vshrl.u32 %v353, 7
    %v355 = vsub.s32 0, %v354
    %v356 = vrot.slane %v344, %v355
    %v357 = vlaneseq
    %v358 = vshrl.u32 %v357, 7
    %v359 = vsub.s32 1, %v358
    %v360 = vrot.slane %v344, %v359
    %361 = vrot.lane.b32.xlu0 %v356, 64
    %v362 = vpop.permute.xlu0 %361
    %363 = vrot.lane.b32.xlu0 %v360, 64
    %v364 = vpop.permute.xlu0 %363
    %vm365 = vcmask 523264
    %v366 = vsel %vm365, %v362, %v364
    %v368 = vsel %vm41, %v351, 0
    %370 = vmatprep.subr.mxu0 0.0
    %371 = vmatpush1.msra.mxu0 0.0
    %372 = vmatprep.subr.mxu0 0.0
    %373 = vmatpush1.msra.mxu0 0.0
    %374 = vmatprep.subr.mxu0 0.0
    %375 = vmatpush1.msra.mxu0 0.0
    %376 = vmatprep.subr.mxu0 0.0
    %377 = vmatpush1.msra.mxu0 0.0
    %378 = vmatprep.subr.mxu0 0.0
    %379 = vmatpush1.msra.mxu0 0.0
    %380 = vmatprep.subr.mxu0 0.0
    %381 = vmatpush1.msra.mxu0 0.0
    %382 = vmatprep.subr.mxu0 0.0
    %383 = vmatpush1.msra.mxu0 0.0
    %384 = vmatprep.subr.mxu0 0.0
    %385 = vmatpush1.msra.mxu0 0.0
    %386 = vmatprep.subr.mxu0 0.0
    %387 = vmatpush1.msra.mxu0 0.0
    %388 = vmatprep.subr.mxu0 0.0
    %389 = vmatpush1.msra.mxu0 0.0
    %390 = vmatprep.subr.mxu0 0.0
    %391 = vmatpush1.msra.mxu0 0.0
    %392 = vmatprep.subr.mxu0 0.0
    %393 = vmatpush1.msra.mxu0 0.0
    %394 = vmatprep.subr.mxu0 0.0
    %395 = vmatpush1.msra.mxu0 %v348
    %396 = vmatprep.subr.mxu0 0.0
    %397 = vmatpush1.msra.mxu0 %v347
    %398 = vmatprep.subr.mxu0 0.0
    %399 = vmatpush1.msra.mxu0 %v346
    %400 = vmatprep.subr.mxu0 0.0
    %401 = vmatpush1.msra.mxu0 %v345
    %402 = vmatprep.subr.mxu0 0.0
    %403 = vmatpush2.msra.mxu0 0.0
    %404 = vmatprep.subr.mxu0 0.0
    %405 = vmatpush2.msra.mxu0 0.0
    %406 = vmatprep.subr.mxu0 0.0
    %407 = vmatpush2.msra.mxu0 0.0
    %408 = vmatprep.subr.mxu0 0.0
    %409 = vmatpush2.msra.mxu0 0.0
    %410 = vmatprep.subr.mxu0 0.0
    %411 = vmatpush2.msra.mxu0 0.0
    %412 = vmatprep.subr.mxu0 0.0
    %413 = vmatpush2.msra.mxu0 0.0
    %414 = vmatprep.subr.mxu0 0.0
    %415 = vmatpush2.msra.mxu0 0.0
    %416 = vmatprep.subr.mxu0 0.0
    %417 = vmatpush2.msra.mxu0 0.0
    %418 = vmatprep.subr.mxu0 0.0
    %419 = vmatpush2.msra.mxu0 0.0
    %420 = vmatprep.subr.mxu0 0.0
    %421 = vmatpush2.msra.mxu0 0.0
    %422 = vmatprep.subr.mxu0 0.0
    %423 = vmatpush2.msra.mxu0 0.0
    %424 = vmatprep.subr.mxu0 0.0
    %425 = vmatpush2.msra.mxu0 0.0
    %426 = vmatprep.subr.mxu0 0.0
    %427 = vmatpush2.msra.mxu0 0.0
    %428 = vmatprep.subr.mxu0 0.0
    %429 = vmatpush2.msra.mxu0 0.0
    %430 = vmatprep.subr.mxu0 0.0
    %431 = vmatpush2.msra.mxu0 0.0
    %432 = vmatprep.subr.mxu0 0.0
    %433 = vmatpush2.msra.mxu0 0.0
    %434 = vmatprep.mubr.f32.mxu0 0.0
    %435 = vmatmul.mubr.f32.gmra.mxu0 %v368
    %v436 = vpop.f32.mrf.mxu0
    %v437 = vadd.f32 %v366, %v436
    %v438 = vpop.f32.mrf.mxu0
    %439 = vdwg.mxu0
    %vm440 = vcmask 1040384
    %v441 = vsel %vm440, %v437, -inf
    %442 = vmax.xlane.f32.xlu0 %v441
    %v443 = vpop.xlane.xlu0 %442
    %v444 = vsub.f32 %v437, %v443
    %v445 = vmul.f32 %v444, 1.442695
    %v446 = vpow.pop %v445
    %v447 = vsel %vm440, %v446, 0.0
    %448 = vadd.xlane.f32.xlu0 %v447
    %v449 = vpop.xlane.xlu0 %448
    %v450 = vrcp.pop %v449
    %v451 = vmul.f32 %v446, %v450
    %452 = vst [vmem:[#allocation3] sm:$0x1] %v451
    // Predicated region
    $region34: #{decoder_forward.1} parent=1 // pred_check
      _
    $region35: #{decoder_forward.1} parent=1 // pred_check_branch
      %454 = sbr.rel (0) target = $region37
    $region36: #{decoder_forward.1} parent=1 // pred_region
      %s456 = ssub.s32 16, 16
      %457 = vsyncadd [#allocation4], %s456
      %s459 = sshll.u32 [#allocation3], 4
      %s460 = int_to_ptr.vmem [resolvable:$true] %s459
      %462 = dma.vmem_to_hbm [thread:$0]  %s460, 16, %s8, [#allocation4]
    $region37: #{decoder_forward.1} parent=1 // pred_fallthru
      _
    // Predicated region
    $region38: #{decoder_forward.1} parent=1 // pred_check
      _
    $region39: #{decoder_forward.1} parent=1 // pred_check_branch
      %464 = sbr.rel (0) target = $region41
    $region40: #{decoder_forward.1} parent=1 // pred_region
      _
    $region41: #{decoder_forward.1} parent=1 // pred_fallthru
      _
    // Predicated region
    $region42: #{decoder_forward.1} parent=1 // pred_check
      _
    $region43: #{decoder_forward.1} parent=1 // pred_check_branch
      %466 = sbr.rel (0) target = $region45
    $region44: #{decoder_forward.1} parent=1 // pred_region
      %467 = dma.done [#allocation4], 16
    $region45: #{decoder_forward.1} parent=1 // pred_fallthru
      _
    // Predicated region
    $region46: #{decoder_forward.1} parent=1 // pred_check
      _
    $region47: #{decoder_forward.1} parent=1 // pred_check_branch
      %469 = sbr.rel (0) target = $region49
    $region48: #{decoder_forward.1} parent=1 // pred_region
      _
    $region49: #{decoder_forward.1} parent=1 // pred_fallthru
      _
    %470 = vsyncpa [#allocation4], 1

</llo_original>
